<compile_context>
chip_gen: v6e
topology: v6e:2x2x1
jax: 0.10.0
libtpu: 0.0.40
codegen_flags: <defaults>
</compile_context>

<pallas_src>
import functools

import jax
import jax.numpy as jnp
from jax import lax
from jax.experimental import pallas as pl
from jax.experimental.pallas import tpu as pltpu

_EPS = 1e-5


def downconv_kernel(m_ref, xp_ref, w1_ref, b1_ref, g1_ref, be1_ref,
                    w2_ref, b2_ref, g2_ref, be2_ref,
                    o_ref, col1_ref, col2_ref, *, wp):
    r = xp_ref.shape[1]              # r = N * HP * WP (flattened batch-spatial)
    n_batch, _, s = o_ref.shape      # s = HP * WP
    inv_r = 1.0 / r

    def conv3x3_bn_relu(inp, col_ref, w_ref, b_ref, g_ref, be_ref):
        c = inp.shape[0]
        # im2col: each 3x3 tap is a lane rotation (XLU slot, no VMEM staging
        # round-trip) of the (c, r) slab, masked by the precomputed 0/1 tap
        # validity mask.  rolled[:, p] == inp[:, p + dy*wp + dx] for in-range
        # taps; wrapped / cross-row / cross-image positions are exactly the
        # ones the mask zeroes.
        k = 0
        for dy in (-1, 0, 1):
            for dx in (-1, 0, 1):
                if dy == 0 and dx == 0:
                    col_ref[k * c:(k + 1) * c, :] = inp
                else:
                    d = dy * wp + dx
                    rolled = pltpu.roll(inp, shift=(-d) % r, axis=1)
                    col_ref[k * c:(k + 1) * c, :] = rolled * m_ref[k]
                k += 1

        # Single MXU matmul per conv with K = 9*c.
        acc = jnp.dot(w_ref[...], col_ref[...],
                      preferred_element_type=jnp.float32,
                      precision=lax.Precision.DEFAULT)
        acc = acc + b_ref[...]

        # BatchNorm2d (training-mode batch stats, biased variance) + ReLU:
        # one-pass sum / sum-of-squares, single fused scale/shift.
        s1 = jnp.sum(acc, axis=1, keepdims=True)
        s2 = jnp.sum(acc * acc, axis=1, keepdims=True)
        mean = s1 * inv_r
        var = s2 * inv_r - mean * mean
        scale = g_ref[...] * lax.rsqrt(var + _EPS)
        shift = be_ref[...] - mean * scale
        return jnp.maximum(acc * scale + shift, 0.0)

    y1 = conv3x3_bn_relu(xp_ref[...], col1_ref, w1_ref, b1_ref, g1_ref, be1_ref)
    y2 = conv3x3_bn_relu(y1, col2_ref, w2_ref, b2_ref, g2_ref, be2_ref)

    # Emit the result directly as (N, Cout, HP*WP) == flattened NCHW so the
    # wrapper reshape is free (no post-kernel transpose pass over the output).
    for nb in range(n_batch):
        o_ref[nb] = y2[:, nb * s:(nb + 1) * s]


@jax.jit
def downconv(x_nchw, w1_t, b1, g1, be1, w2_t, b2, g2, be2):
    n, cin, h, w = x_nchw.shape
    cout = w1_t.shape[0]
    hp, wp = h // 2, w // 2
    r = n * hp * wp

    # Glue (one fused XLA pass over x): 2x2/stride-2 max-pool and relayout to
    # the lane-dense (Cin, N*HP*WP) slab the kernel works in.
    pooled = jnp.max(x_nchw.reshape(n, cin, hp, 2, wp, 2), axis=(3, 5))
    xp = jnp.transpose(pooled, (1, 0, 2, 3)).reshape(cin, r)

    # Conv weights packed as (Cout, 9*Cin) with column order (tap, cin) to
    # match the im2col row order; tiny one-time reshapes.
    w1 = jnp.transpose(w1_t, (0, 2, 3, 1)).reshape(cout, 9 * cin)
    w2 = jnp.transpose(w2_t, (0, 2, 3, 1)).reshape(cout, 9 * cout)

    # Data-independent 0/1 tap-validity masks, shape (9, 1, r): position
    # (h, w) reading tap (dy, dx) is valid iff (h+dy, w+dx) stays inside the
    # HP x WP image (this also blocks reads that would cross into the
    # neighbouring image of the flattened batch dim, and kills the circular
    # wrap of the in-kernel lane rotations).  XLA constant-folds it.
    ridx = jnp.arange(r, dtype=jnp.int32)
    wpos = ridx % wp
    hpos = (ridx // wp) % hp
    mlist = []
    for dy in (-1, 0, 1):
        for dx in (-1, 0, 1):
            mlist.append((hpos + dy >= 0) & (hpos + dy < hp)
                         & (wpos + dx >= 0) & (wpos + dx < wp))
    masks = jnp.stack(mlist).astype(jnp.float32).reshape(9, 1, r)

    # NOTE: the whole problem at these shapes is a few KiB and BatchNorm's
    # batch statistics couple all of N*HP*WP before the second conv can run,
    # so this stays a single un-gridded invocation.  Scaling to large shapes
    # would need a multi-pass grid with cross-step sum/sumsq accumulation
    # (per-tile BN stats would be wrong), not naive tiling.
    vmem = pl.BlockSpec(memory_space=pltpu.MemorySpace.VMEM)
    out = pl.pallas_call(
        functools.partial(downconv_kernel, wp=wp),
        out_shape=jax.ShapeDtypeStruct((n, cout, hp * wp), jnp.float32),
        in_specs=[vmem] * 10,
        out_specs=vmem,
        scratch_shapes=[
            pltpu.VMEM((9 * cin, r), jnp.float32),    # conv1 im2col
            pltpu.VMEM((9 * cout, r), jnp.float32),   # conv2 im2col
        ],
    )(masks, xp,
      w1, b1.reshape(-1, 1), g1.reshape(-1, 1), be1.reshape(-1, 1),
      w2, b2.reshape(-1, 1), g2.reshape(-1, 1), be2.reshape(-1, 1))

    return out.reshape(n, cout, hp, wp)     # NCHW, free reshape


def reference(x_nchw, w1_t, b1, g1, be1, w2_t, b2, g2, be2):
    """Pure-JAX reference mirroring the PyTorch forward (full f32)."""
    n, c, h, w = x_nchw.shape
    xp = jnp.max(x_nchw.reshape(n, c, h // 2, 2, w // 2, 2), axis=(3, 5))

    def conv_bn_relu(x, w_t, b, g, be):
        y = lax.conv_general_dilated(
            x, w_t, window_strides=(1, 1), padding=((1, 1), (1, 1)),
            dimension_numbers=("NCHW", "OIHW", "NCHW"),
            precision=lax.Precision.HIGHEST)
        y = y + b[None, :, None, None]
        mean = jnp.mean(y, axis=(0, 2, 3), keepdims=True)
        var = jnp.mean((y - mean) ** 2, axis=(0, 2, 3), keepdims=True)
        y = (y - mean) * lax.rsqrt(var + _EPS)
        y = y * g[None, :, None, None] + be[None, :, None, None]
        return jnp.maximum(y, 0.0)

    y = conv_bn_relu(xp, w1_t, b1, g1, be1)
    return conv_bn_relu(y, w2_t, b2, g2, be2)


if __name__ == "__main__":
    in_ch, out_ch = 4, 8
    n, h, w = 2, 16, 16

    key = jax.random.PRNGKey(0)
    ks = jax.random.split(key, 9)
    x = jax.random.normal(ks[0], (n, in_ch, h, w), jnp.float32)

    # Deterministic synthetic parameters (PyTorch layouts: Conv2d OIHW, BN per-channel)
    w1_t = 0.2 * jax.random.normal(ks[1], (out_ch, in_ch, 3, 3), jnp.float32)
    b1 = 0.1 * jax.random.normal(ks[2], (out_ch,), jnp.float32)
    g1 = 1.0 + 0.1 * jax.random.normal(ks[3], (out_ch,), jnp.float32)
    be1 = 0.1 * jax.random.normal(ks[4], (out_ch,), jnp.float32)
    w2_t = 0.2 * jax.random.normal(ks[5], (out_ch, out_ch, 3, 3), jnp.float32)
    b2 = 0.1 * jax.random.normal(ks[6], (out_ch,), jnp.float32)
    g2 = 1.0 + 0.1 * jax.random.normal(ks[7], (out_ch,), jnp.float32)
    be2 = 0.1 * jax.random.normal(ks[8], (out_ch,), jnp.float32)

    out = downconv(x, w1_t, b1, g1, be1, w2_t, b2, g2, be2)
    out = jax.block_until_ready(out)

    ref = reference(x, w1_t, b1, g1, be1, w2_t, b2, g2, be2)
    assert out.shape == (n, out_ch, h // 2, w // 2), out.shape
    # Kernel matmuls intentionally run in the MXU's native one-pass bf16 mode
    # while the reference conv runs in full f32, so the tolerance covers bf16
    # rounding through two conv+BN layers (~1e-2); algorithmic bugs would show
    # up as O(1) errors.
    err = float(jnp.max(jnp.abs(out - ref)))
    assert jnp.allclose(out, ref, atol=3e-2, rtol=3e-2), err

    print("KERNEL_OK")
</pallas_src>

<mosaic_0001>
module attributes {stable_mosaic.version = 11 : i64} {
  func.func @downconv_kernel(%arg0: memref<9x1x128xf32, #tpu.memory_space<vmem>>, %arg1: memref<4x128xf32, #tpu.memory_space<vmem>>, %arg2: memref<8x36xf32, #tpu.memory_space<vmem>>, %arg3: memref<8x1xf32, #tpu.memory_space<vmem>>, %arg4: memref<8x1xf32, #tpu.memory_space<vmem>>, %arg5: memref<8x1xf32, #tpu.memory_space<vmem>>, %arg6: memref<8x72xf32, #tpu.memory_space<vmem>>, %arg7: memref<8x1xf32, #tpu.memory_space<vmem>>, %arg8: memref<8x1xf32, #tpu.memory_space<vmem>>, %arg9: memref<8x1xf32, #tpu.memory_space<vmem>>, %arg10: memref<2x8x64xf32, #tpu.memory_space<vmem>>, %arg11: memref<36x128xf32, #tpu.memory_space<vmem>>, %arg12: memref<72x128xf32, #tpu.memory_space<vmem>>) attributes {dimension_semantics = [], scalar_prefetch = 0 : i64, scratch_operands = 2 : i64, tpu.core_type = #tpu.core_type<tc>} {
    %c0 = arith.constant 0 : index
    %c0_0 = arith.constant 0 : index
    %0 = vector.load %arg1[%c0, %c0_0] : memref<4x128xf32, #tpu.memory_space<vmem>>, vector<4x128xf32>
    %c9_i32 = arith.constant 9 : i32
    %1 = tpu.dynamic_rotate %0 by %c9_i32 dim 1 : vector<4x128xf32>, i32 -> vector<4x128xf32>
    %c0_1 = arith.constant 0 : index
    %c0_2 = arith.constant 0 : index
    %c0_3 = arith.constant 0 : index
    %2 = vector.load %arg0[%c0_1, %c0_2, %c0_3] : memref<9x1x128xf32, #tpu.memory_space<vmem>>, vector<1x1x128xf32>
    %3 = vector.shape_cast %2 : vector<1x1x128xf32> to vector<1x128xf32>
    %4 = vector.broadcast %3 : vector<1x128xf32> to vector<4x128xf32>
    %5 = arith.mulf %1, %4 : vector<4x128xf32>
    %c0_4 = arith.constant 0 : index
    %c0_5 = arith.constant 0 : index
    %6 = vector.load %arg11[%c0_4, %c0_5] : memref<36x128xf32, #tpu.memory_space<vmem>>, vector<4x128xf32>
    tpu.vector_store %arg11[%c0_4, %c0_5], %5 {strides = array<i32>} : memref<36x128xf32, #tpu.memory_space<vmem>>, vector<4x128xf32>,
    %c8_i32 = arith.constant 8 : i32
    %7 = tpu.dynamic_rotate %0 by %c8_i32 dim 1 : vector<4x128xf32>, i32 -> vector<4x128xf32>
    %c1 = arith.constant 1 : index
    %c0_6 = arith.constant 0 : index
    %c0_7 = arith.constant 0 : index
    %8 = vector.load %arg0[%c1, %c0_6, %c0_7] : memref<9x1x128xf32, #tpu.memory_space<vmem>>, vector<1x1x128xf32>
    %9 = vector.shape_cast %8 : vector<1x1x128xf32> to vector<1x128xf32>
    %10 = vector.broadcast %9 : vector<1x128xf32> to vector<4x128xf32>
    %11 = arith.mulf %7, %10 : vector<4x128xf32>
    %c4 = arith.constant 4 : index
    %c0_8 = arith.constant 0 : index
    %12 = vector.load %arg11[%c4, %c0_8] : memref<36x128xf32, #tpu.memory_space<vmem>>, vector<4x128xf32>
    tpu.vector_store %arg11[%c4, %c0_8], %11 {strides = array<i32>} : memref<36x128xf32, #tpu.memory_space<vmem>>, vector<4x128xf32>,
    %c7_i32 = arith.constant 7 : i32
    %13 = tpu.dynamic_rotate %0 by %c7_i32 dim 1 : vector<4x128xf32>, i32 -> vector<4x128xf32>
    %c2 = arith.constant 2 : index
    %c0_9 = arith.constant 0 : index
    %c0_10 = arith.constant 0 : index
    %14 = vector.load %arg0[%c2, %c0_9, %c0_10] : memref<9x1x128xf32, #tpu.memory_space<vmem>>, vector<1x1x128xf32>
    %15 = vector.shape_cast %14 : vector<1x1x128xf32> to vector<1x128xf32>
    %16 = vector.broadcast %15 : vector<1x128xf32> to vector<4x128xf32>
    %17 = arith.mulf %13, %16 : vector<4x128xf32>
    %c8 = arith.constant 8 : index
    %c0_11 = arith.constant 0 : index
    %18 = vector.load %arg11[%c8, %c0_11] : memref<36x128xf32, #tpu.memory_space<vmem>>, vector<4x128xf32>
    tpu.vector_store %arg11[%c8, %c0_11], %17 {strides = array<i32>} : memref<36x128xf32, #tpu.memory_space<vmem>>, vector<4x128xf32>,
    %c1_i32 = arith.constant 1 : i32
    %19 = tpu.dynamic_rotate %0 by %c1_i32 dim 1 : vector<4x128xf32>, i32 -> vector<4x128xf32>
    %c3 = arith.constant 3 : index
    %c0_12 = arith.constant 0 : index
    %c0_13 = arith.constant 0 : index
    %20 = vector.load %arg0[%c3, %c0_12, %c0_13] : memref<9x1x128xf32, #tpu.memory_space<vmem>>, vector<1x1x128xf32>
    %21 = vector.shape_cast %20 : vector<1x1x128xf32> to vector<1x128xf32>
    %22 = vector.broadcast %21 : vector<1x128xf32> to vector<4x128xf32>
    %23 = arith.mulf %19, %22 : vector<4x128xf32>
    %c12 = arith.constant 12 : index
    %c0_14 = arith.constant 0 : index
    %24 = vector.load %arg11[%c12, %c0_14] : memref<36x128xf32, #tpu.memory_space<vmem>>, vector<4x128xf32>
    tpu.vector_store %arg11[%c12, %c0_14], %23 {strides = array<i32>} : memref<36x128xf32, #tpu.memory_space<vmem>>, vector<4x128xf32>,
    %c16 = arith.constant 16 : index
    %c0_15 = arith.constant 0 : index
    %25 = vector.load %arg11[%c16, %c0_15] : memref<36x128xf32, #tpu.memory_space<vmem>>, vector<4x128xf32>
    tpu.vector_store %arg11[%c16, %c0_15], %0 {strides = array<i32>} : memref<36x128xf32, #tpu.memory_space<vmem>>, vector<4x128xf32>,
    %c127_i32 = arith.constant 127 : i32
    %26 = tpu.dynamic_rotate %0 by %c127_i32 dim 1 : vector<4x128xf32>, i32 -> vector<4x128xf32>
    %c5 = arith.constant 5 : index
    %c0_16 = arith.constant 0 : index
    %c0_17 = arith.constant 0 : index
    %27 = vector.load %arg0[%c5, %c0_16, %c0_17] : memref<9x1x128xf32, #tpu.memory_space<vmem>>, vector<1x1x128xf32>
    %28 = vector.shape_cast %27 : vector<1x1x128xf32> to vector<1x128xf32>
    %29 = vector.broadcast %28 : vector<1x128xf32> to vector<4x128xf32>
    %30 = arith.mulf %26, %29 : vector<4x128xf32>
    %c20 = arith.constant 20 : index
    %c0_18 = arith.constant 0 : index
    %31 = vector.load %arg11[%c20, %c0_18] : memref<36x128xf32, #tpu.memory_space<vmem>>, vector<4x128xf32>
    tpu.vector_store %arg11[%c20, %c0_18], %30 {strides = array<i32>} : memref<36x128xf32, #tpu.memory_space<vmem>>, vector<4x128xf32>,
    %c121_i32 = arith.constant 121 : i32
    %32 = tpu.dynamic_rotate %0 by %c121_i32 dim 1 : vector<4x128xf32>, i32 -> vector<4x128xf32>
    %c6 = arith.constant 6 : index
    %c0_19 = arith.constant 0 : index
    %c0_20 = arith.constant 0 : index
    %33 = vector.load %arg0[%c6, %c0_19, %c0_20] : memref<9x1x128xf32, #tpu.memory_space<vmem>>, vector<1x1x128xf32>
    %34 = vector.shape_cast %33 : vector<1x1x128xf32> to vector<1x128xf32>
    %35 = vector.broadcast %34 : vector<1x128xf32> to vector<4x128xf32>
    %36 = arith.mulf %32, %35 : vector<4x128xf32>
    %c24 = arith.constant 24 : index
    %c0_21 = arith.constant 0 : index
    %37 = vector.load %arg11[%c24, %c0_21] : memref<36x128xf32, #tpu.memory_space<vmem>>, vector<4x128xf32>
    tpu.vector_store %arg11[%c24, %c0_21], %36 {strides = array<i32>} : memref<36x128xf32, #tpu.memory_space<vmem>>, vector<4x128xf32>,
    %c120_i32 = arith.constant 120 : i32
    %38 = tpu.dynamic_rotate %0 by %c120_i32 dim 1 : vector<4x128xf32>, i32 -> vector<4x128xf32>
    %c7 = arith.constant 7 : index
    %c0_22 = arith.constant 0 : index
    %c0_23 = arith.constant 0 : index
    %39 = vector.load %arg0[%c7, %c0_22, %c0_23] : memref<9x1x128xf32, #tpu.memory_space<vmem>>, vector<1x1x128xf32>
    %40 = vector.shape_cast %39 : vector<1x1x128xf32> to vector<1x128xf32>
    %41 = vector.broadcast %40 : vector<1x128xf32> to vector<4x128xf32>
    %42 = arith.mulf %38, %41 : vector<4x128xf32>
    %c28 = arith.constant 28 : index
    %c0_24 = arith.constant 0 : index
    %43 = vector.load %arg11[%c28, %c0_24] : memref<36x128xf32, #tpu.memory_space<vmem>>, vector<4x128xf32>
    tpu.vector_store %arg11[%c28, %c0_24], %42 {strides = array<i32>} : memref<36x128xf32, #tpu.memory_space<vmem>>, vector<4x128xf32>,
    %c119_i32 = arith.constant 119 : i32
    %44 = tpu.dynamic_rotate %0 by %c119_i32 dim 1 : vector<4x128xf32>, i32 -> vector<4x128xf32>
    %c8_25 = arith.constant 8 : index
    %c0_26 = arith.constant 0 : index
    %c0_27 = arith.constant 0 : index
    %45 = vector.load %arg0[%c8_25, %c0_26, %c0_27] : memref<9x1x128xf32, #tpu.memory_space<vmem>>, vector<1x1x128xf32>
    %46 = vector.shape_cast %45 : vector<1x1x128xf32> to vector<1x128xf32>
    %47 = vector.broadcast %46 : vector<1x128xf32> to vector<4x128xf32>
    %48 = arith.mulf %44, %47 : vector<4x128xf32>
    %c32 = arith.constant 32 : index
    %c0_28 = arith.constant 0 : index
    %49 = vector.load %arg11[%c32, %c0_28] : memref<36x128xf32, #tpu.memory_space<vmem>>, vector<4x128xf32>
    tpu.vector_store %arg11[%c32, %c0_28], %48 {strides = array<i32>} : memref<36x128xf32, #tpu.memory_space<vmem>>, vector<4x128xf32>,
    %c0_29 = arith.constant 0 : index
    %c0_30 = arith.constant 0 : index
    %50 = vector.load %arg2[%c0_29, %c0_30] : memref<8x36xf32, #tpu.memory_space<vmem>>, vector<8x36xf32>
    %c0_31 = arith.constant 0 : index
    %c0_32 = arith.constant 0 : index
    %51 = vector.load %arg11[%c0_31, %c0_32] : memref<36x128xf32, #tpu.memory_space<vmem>>, vector<36x128xf32>
    %cst = arith.constant dense<0.000000e+00> : vector<8x128xf32>
    %52 = tpu.matmul %50, %51, %cst {dimension_numbers = #tpu.dot_dimension_numbers<[1], [0], [0], [1], [0, 0, 1, 1], [], []>} : vector<8x36xf32>, vector<36x128xf32>, vector<8x128xf32> -> vector<8x128xf32>
    %c0_33 = arith.constant 0 : index
    %c0_34 = arith.constant 0 : index
    %53 = vector.load %arg3[%c0_33, %c0_34] : memref<8x1xf32, #tpu.memory_space<vmem>>, vector<8x1xf32>
    %54 = vector.broadcast %53 : vector<8x1xf32> to vector<8x128xf32>
    %55 = arith.addf %52, %54 : vector<8x128xf32>
    %cst_35 = arith.constant dense<0.000000e+00> : vector<8xf32>
    %56 = vector.multi_reduction <add>, %55, %cst_35 [1] : vector<8x128xf32> to vector<8xf32>
    %57 = vector.shape_cast %56 : vector<8xf32> to vector<8x1xf32>
    %58 = arith.mulf %55, %55 : vector<8x128xf32>
    %cst_36 = arith.constant dense<0.000000e+00> : vector<8xf32>
    %59 = vector.multi_reduction <add>, %58, %cst_36 [1] : vector<8x128xf32> to vector<8xf32>
    %60 = vector.shape_cast %59 : vector<8xf32> to vector<8x1xf32>
    %cst_37 = arith.constant 7.812500e-03 : f32
    %61 = vector.broadcast %cst_37 : f32 to vector<8x1xf32>
    %62 = arith.mulf %57, %61 : vector<8x1xf32>
    %cst_38 = arith.constant 7.812500e-03 : f32
    %63 = vector.broadcast %cst_38 : f32 to vector<8x1xf32>
    %64 = arith.mulf %60, %63 : vector<8x1xf32>
    %65 = arith.mulf %62, %62 : vector<8x1xf32>
    %66 = arith.subf %64, %65 : vector<8x1xf32>
    %c0_39 = arith.constant 0 : index
    %c0_40 = arith.constant 0 : index
    %67 = vector.load %arg4[%c0_39, %c0_40] : memref<8x1xf32, #tpu.memory_space<vmem>>, vector<8x1xf32>
    %cst_41 = arith.constant 9.99999974E-6 : f32
    %68 = vector.broadcast %cst_41 : f32 to vector<8x1xf32>
    %69 = arith.addf %66, %68 : vector<8x1xf32>
    %70 = math.rsqrt %69 : vector<8x1xf32>
    %71 = arith.mulf %67, %70 : vector<8x1xf32>
    %c0_42 = arith.constant 0 : index
    %c0_43 = arith.constant 0 : index
    %72 = vector.load %arg5[%c0_42, %c0_43] : memref<8x1xf32, #tpu.memory_space<vmem>>, vector<8x1xf32>
    %73 = arith.mulf %62, %71 : vector<8x1xf32>
    %74 = arith.subf %72, %73 : vector<8x1xf32>
    %75 = vector.broadcast %71 : vector<8x1xf32> to vector<8x128xf32>
    %76 = arith.mulf %55, %75 : vector<8x128xf32>
    %77 = vector.broadcast %74 : vector<8x1xf32> to vector<8x128xf32>
    %78 = arith.addf %76, %77 : vector<8x128xf32>
    %cst_44 = arith.constant 0.000000e+00 : f32
    %79 = vector.broadcast %cst_44 : f32 to vector<8x128xf32>
    %80 = arith.maximumf %78, %79 : vector<8x128xf32>
    %c9_i32_45 = arith.constant 9 : i32
    %81 = tpu.dynamic_rotate %80 by %c9_i32_45 dim 1 : vector<8x128xf32>, i32 -> vector<8x128xf32>
    %c0_46 = arith.constant 0 : index
    %c0_47 = arith.constant 0 : index
    %c0_48 = arith.constant 0 : index
    %82 = vector.load %arg0[%c0_46, %c0_47, %c0_48] : memref<9x1x128xf32, #tpu.memory_space<vmem>>, vector<1x1x128xf32>
    %83 = vector.shape_cast %82 : vector<1x1x128xf32> to vector<1x128xf32>
    %84 = vector.broadcast %83 : vector<1x128xf32> to vector<8x128xf32>
    %85 = arith.mulf %81, %84 : vector<8x128xf32>
    %c0_49 = arith.constant 0 : index
    %c0_50 = arith.constant 0 : index
    %86 = vector.load %arg12[%c0_49, %c0_50] : memref<72x128xf32, #tpu.memory_space<vmem>>, vector<8x128xf32>
    tpu.vector_store %arg12[%c0_49, %c0_50], %85 {strides = array<i32>} : memref<72x128xf32, #tpu.memory_space<vmem>>, vector<8x128xf32>,
    %c8_i32_51 = arith.constant 8 : i32
    %87 = tpu.dynamic_rotate %80 by %c8_i32_51 dim 1 : vector<8x128xf32>, i32 -> vector<8x128xf32>
    %c1_52 = arith.constant 1 : index
    %c0_53 = arith.constant 0 : index
    %c0_54 = arith.constant 0 : index
    %88 = vector.load %arg0[%c1_52, %c0_53, %c0_54] : memref<9x1x128xf32, #tpu.memory_space<vmem>>, vector<1x1x128xf32>
    %89 = vector.shape_cast %88 : vector<1x1x128xf32> to vector<1x128xf32>
    %90 = vector.broadcast %89 : vector<1x128xf32> to vector<8x128xf32>
    %91 = arith.mulf %87, %90 : vector<8x128xf32>
    %c8_55 = arith.constant 8 : index
    %c0_56 = arith.constant 0 : index
    %92 = vector.load %arg12[%c8_55, %c0_56] : memref<72x128xf32, #tpu.memory_space<vmem>>, vector<8x128xf32>
    tpu.vector_store %arg12[%c8_55, %c0_56], %91 {strides = array<i32>} : memref<72x128xf32, #tpu.memory_space<vmem>>, vector<8x128xf32>,
    %c7_i32_57 = arith.constant 7 : i32
    %93 = tpu.dynamic_rotate %80 by %c7_i32_57 dim 1 : vector<8x128xf32>, i32 -> vector<8x128xf32>
    %c2_58 = arith.constant 2 : index
    %c0_59 = arith.constant 0 : index
    %c0_60 = arith.constant 0 : index
    %94 = vector.load %arg0[%c2_58, %c0_59, %c0_60] : memref<9x1x128xf32, #tpu.memory_space<vmem>>, vector<1x1x128xf32>
    %95 = vector.shape_cast %94 : vector<1x1x128xf32> to vector<1x128xf32>
    %96 = vector.broadcast %95 : vector<1x128xf32> to vector<8x128xf32>
    %97 = arith.mulf %93, %96 : vector<8x128xf32>
    %c16_61 = arith.constant 16 : index
    %c0_62 = arith.constant 0 : index
    %98 = vector.load %arg12[%c16_61, %c0_62] : memref<72x128xf32, #tpu.memory_space<vmem>>, vector<8x128xf32>
    tpu.vector_store %arg12[%c16_61, %c0_62], %97 {strides = array<i32>} : memref<72x128xf32, #tpu.memory_space<vmem>>, vector<8x128xf32>,
    %c1_i32_63 = arith.constant 1 : i32
    %99 = tpu.dynamic_rotate %80 by %c1_i32_63 dim 1 : vector<8x128xf32>, i32 -> vector<8x128xf32>
    %c3_64 = arith.constant 3 : index
    %c0_65 = arith.constant 0 : index
    %c0_66 = arith.constant 0 : index
    %100 = vector.load %arg0[%c3_64, %c0_65, %c0_66] : memref<9x1x128xf32, #tpu.memory_space<vmem>>, vector<1x1x128xf32>
    %101 = vector.shape_cast %100 : vector<1x1x128xf32> to vector<1x128xf32>
    %102 = vector.broadcast %101 : vector<1x128xf32> to vector<8x128xf32>
    %103 = arith.mulf %99, %102 : vector<8x128xf32>
    %c24_67 = arith.constant 24 : index
    %c0_68 = arith.constant 0 : index
    %104 = vector.load %arg12[%c24_67, %c0_68] : memref<72x128xf32, #tpu.memory_space<vmem>>, vector<8x128xf32>
    tpu.vector_store %arg12[%c24_67, %c0_68], %103 {strides = array<i32>} : memref<72x128xf32, #tpu.memory_space<vmem>>, vector<8x128xf32>,
    %c32_69 = arith.constant 32 : index
    %c0_70 = arith.constant 0 : index
    %105 = vector.load %arg12[%c32_69, %c0_70] : memref<72x128xf32, #tpu.memory_space<vmem>>, vector<8x128xf32>
    tpu.vector_store %arg12[%c32_69, %c0_70], %80 {strides = array<i32>} : memref<72x128xf32, #tpu.memory_space<vmem>>, vector<8x128xf32>,
    %c127_i32_71 = arith.constant 127 : i32
    %106 = tpu.dynamic_rotate %80 by %c127_i32_71 dim 1 : vector<8x128xf32>, i32 -> vector<8x128xf32>
    %c5_72 = arith.constant 5 : index
    %c0_73 = arith.constant 0 : index
    %c0_74 = arith.constant 0 : index
    %107 = vector.load %arg0[%c5_72, %c0_73, %c0_74] : memref<9x1x128xf32, #tpu.memory_space<vmem>>, vector<1x1x128xf32>
    %108 = vector.shape_cast %107 : vector<1x1x128xf32> to vector<1x128xf32>
    %109 = vector.broadcast %108 : vector<1x128xf32> to vector<8x128xf32>
    %110 = arith.mulf %106, %109 : vector<8x128xf32>
    %c40 = arith.constant 40 : index
    %c0_75 = arith.constant 0 : index
    %111 = vector.load %arg12[%c40, %c0_75] : memref<72x128xf32, #tpu.memory_space<vmem>>, vector<8x128xf32>
    tpu.vector_store %arg12[%c40, %c0_75], %110 {strides = array<i32>} : memref<72x128xf32, #tpu.memory_space<vmem>>, vector<8x128xf32>,
    %c121_i32_76 = arith.constant 121 : i32
    %112 = tpu.dynamic_rotate %80 by %c121_i32_76 dim 1 : vector<8x128xf32>, i32 -> vector<8x128xf32>
    %c6_77 = arith.constant 6 : index
    %c0_78 = arith.constant 0 : index
    %c0_79 = arith.constant 0 : index
    %113 = vector.load %arg0[%c6_77, %c0_78, %c0_79] : memref<9x1x128xf32, #tpu.memory_space<vmem>>, vector<1x1x128xf32>
    %114 = vector.shape_cast %113 : vector<1x1x128xf32> to vector<1x128xf32>
    %115 = vector.broadcast %114 : vector<1x128xf32> to vector<8x128xf32>
    %116 = arith.mulf %112, %115 : vector<8x128xf32>
    %c48 = arith.constant 48 : index
    %c0_80 = arith.constant 0 : index
    %117 = vector.load %arg12[%c48, %c0_80] : memref<72x128xf32, #tpu.memory_space<vmem>>, vector<8x128xf32>
    tpu.vector_store %arg12[%c48, %c0_80], %116 {strides = array<i32>} : memref<72x128xf32, #tpu.memory_space<vmem>>, vector<8x128xf32>,
    %c120_i32_81 = arith.constant 120 : i32
    %118 = tpu.dynamic_rotate %80 by %c120_i32_81 dim 1 : vector<8x128xf32>, i32 -> vector<8x128xf32>
    %c7_82 = arith.constant 7 : index
    %c0_83 = arith.constant 0 : index
    %c0_84 = arith.constant 0 : index
    %119 = vector.load %arg0[%c7_82, %c0_83, %c0_84] : memref<9x1x128xf32, #tpu.memory_space<vmem>>, vector<1x1x128xf32>
    %120 = vector.shape_cast %119 : vector<1x1x128xf32> to vector<1x128xf32>
    %121 = vector.broadcast %120 : vector<1x128xf32> to vector<8x128xf32>
    %122 = arith.mulf %118, %121 : vector<8x128xf32>
    %c56 = arith.constant 56 : index
    %c0_85 = arith.constant 0 : index
    %123 = vector.load %arg12[%c56, %c0_85] : memref<72x128xf32, #tpu.memory_space<vmem>>, vector<8x128xf32>
    tpu.vector_store %arg12[%c56, %c0_85], %122 {strides = array<i32>} : memref<72x128xf32, #tpu.memory_space<vmem>>, vector<8x128xf32>,
    %c119_i32_86 = arith.constant 119 : i32
    %124 = tpu.dynamic_rotate %80 by %c119_i32_86 dim 1 : vector<8x128xf32>, i32 -> vector<8x128xf32>
    %c8_87 = arith.constant 8 : index
    %c0_88 = arith.constant 0 : index
    %c0_89 = arith.constant 0 : index
    %125 = vector.load %arg0[%c8_87, %c0_88, %c0_89] : memref<9x1x128xf32, #tpu.memory_space<vmem>>, vector<1x1x128xf32>
    %126 = vector.shape_cast %125 : vector<1x1x128xf32> to vector<1x128xf32>
    %127 = vector.broadcast %126 : vector<1x128xf32> to vector<8x128xf32>
    %128 = arith.mulf %124, %127 : vector<8x128xf32>
    %c64 = arith.constant 64 : index
    %c0_90 = arith.constant 0 : index
    %129 = vector.load %arg12[%c64, %c0_90] : memref<72x128xf32, #tpu.memory_space<vmem>>, vector<8x128xf32>
    tpu.vector_store %arg12[%c64, %c0_90], %128 {strides = array<i32>} : memref<72x128xf32, #tpu.memory_space<vmem>>, vector<8x128xf32>,
    %c0_91 = arith.constant 0 : index
    %c0_92 = arith.constant 0 : index
    %130 = vector.load %arg6[%c0_91, %c0_92] : memref<8x72xf32, #tpu.memory_space<vmem>>, vector<8x72xf32>
    %c0_93 = arith.constant 0 : index
    %c0_94 = arith.constant 0 : index
    %131 = vector.load %arg12[%c0_93, %c0_94] : memref<72x128xf32, #tpu.memory_space<vmem>>, vector<72x128xf32>
    %cst_95 = arith.constant dense<0.000000e+00> : vector<8x128xf32>
    %132 = tpu.matmul %130, %131, %cst_95 {dimension_numbers = #tpu.dot_dimension_numbers<[1], [0], [0], [1], [0, 0, 1, 1], [], []>} : vector<8x72xf32>, vector<72x128xf32>, vector<8x128xf32> -> vector<8x128xf32>
    %c0_96 = arith.constant 0 : index
    %c0_97 = arith.constant 0 : index
    %133 = vector.load %arg7[%c0_96, %c0_97] : memref<8x1xf32, #tpu.memory_space<vmem>>, vector<8x1xf32>
    %134 = vector.broadcast %133 : vector<8x1xf32> to vector<8x128xf32>
    %135 = arith.addf %132, %134 : vector<8x128xf32>
    %cst_98 = arith.constant dense<0.000000e+00> : vector<8xf32>
    %136 = vector.multi_reduction <add>, %135, %cst_98 [1] : vector<8x128xf32> to vector<8xf32>
    %137 = vector.shape_cast %136 : vector<8xf32> to vector<8x1xf32>
    %138 = arith.mulf %135, %135 : vector<8x128xf32>
    %cst_99 = arith.constant dense<0.000000e+00> : vector<8xf32>
    %139 = vector.multi_reduction <add>, %138, %cst_99 [1] : vector<8x128xf32> to vector<8xf32>
    %140 = vector.shape_cast %139 : vector<8xf32> to vector<8x1xf32>
    %cst_100 = arith.constant 7.812500e-03 : f32
    %141 = vector.broadcast %cst_100 : f32 to vector<8x1xf32>
    %142 = arith.mulf %137, %141 : vector<8x1xf32>
    %cst_101 = arith.constant 7.812500e-03 : f32
    %143 = vector.broadcast %cst_101 : f32 to vector<8x1xf32>
    %144 = arith.mulf %140, %143 : vector<8x1xf32>
    %145 = arith.mulf %142, %142 : vector<8x1xf32>
    %146 = arith.subf %144, %145 : vector<8x1xf32>
    %c0_102 = arith.constant 0 : index
    %c0_103 = arith.constant 0 : index
    %147 = vector.load %arg8[%c0_102, %c0_103] : memref<8x1xf32, #tpu.memory_space<vmem>>, vector<8x1xf32>
    %cst_104 = arith.constant 9.99999974E-6 : f32
    %148 = vector.broadcast %cst_104 : f32 to vector<8x1xf32>
    %149 = arith.addf %146, %148 : vector<8x1xf32>
    %150 = math.rsqrt %149 : vector<8x1xf32>
    %151 = arith.mulf %147, %150 : vector<8x1xf32>
    %c0_105 = arith.constant 0 : index
    %c0_106 = arith.constant 0 : index
    %152 = vector.load %arg9[%c0_105, %c0_106] : memref<8x1xf32, #tpu.memory_space<vmem>>, vector<8x1xf32>
    %153 = arith.mulf %142, %151 : vector<8x1xf32>
    %154 = arith.subf %152, %153 : vector<8x1xf32>
    %155 = vector.broadcast %151 : vector<8x1xf32> to vector<8x128xf32>
    %156 = arith.mulf %135, %155 : vector<8x128xf32>
    %157 = vector.broadcast %154 : vector<8x1xf32> to vector<8x128xf32>
    %158 = arith.addf %156, %157 : vector<8x128xf32>
    %cst_107 = arith.constant 0.000000e+00 : f32
    %159 = vector.broadcast %cst_107 : f32 to vector<8x128xf32>
    %160 = arith.maximumf %158, %159 : vector<8x128xf32>
    %161 = vector.extract_strided_slice %160 {offsets = [0, 0], sizes = [8, 64], strides = [1, 1]} : vector<8x128xf32> to vector<8x64xf32>
    %c0_108 = arith.constant 0 : index
    %c0_109 = arith.constant 0 : index
    %c0_110 = arith.constant 0 : index
    %162 = vector.load %arg10[%c0_108, %c0_109, %c0_110] : memref<2x8x64xf32, #tpu.memory_space<vmem>>, vector<1x8x64xf32>
    %163 = vector.shape_cast %162 : vector<1x8x64xf32> to vector<8x64xf32>
    %164 = vector.shape_cast %161 : vector<8x64xf32> to vector<1x8x64xf32>
    tpu.vector_store %arg10[%c0_108, %c0_109, %c0_110], %164 {strides = array<i32>} : memref<2x8x64xf32, #tpu.memory_space<vmem>>, vector<1x8x64xf32>,
    %165 = vector.extract_strided_slice %160 {offsets = [0, 64], sizes = [8, 64], strides = [1, 1]} : vector<8x128xf32> to vector<8x64xf32>
    %c1_111 = arith.constant 1 : index
    %c0_112 = arith.constant 0 : index
    %c0_113 = arith.constant 0 : index
    %166 = vector.load %arg10[%c1_111, %c0_112, %c0_113] : memref<2x8x64xf32, #tpu.memory_space<vmem>>, vector<1x8x64xf32>
    %167 = vector.shape_cast %166 : vector<1x8x64xf32> to vector<8x64xf32>
    %168 = vector.shape_cast %165 : vector<8x64xf32> to vector<1x8x64xf32>
    tpu.vector_store %arg10[%c1_111, %c0_112, %c0_113], %168 {strides = array<i32>} : memref<2x8x64xf32, #tpu.memory_space<vmem>>, vector<1x8x64xf32>,
    return
  }
}

</mosaic_0001>

<llo_original>
// kernel: downconv.1
$region0: #{downconv.1}
  #allocation0 [shape = 'u32[]', space=smem, size = 0x4, offset = 0x4, fixed_abs, tag = 'smem constant byte address 0x4 - core index']
  #allocation1 [shape = 'u32[144,128]{1,0:T(1,128)}', space=vmem, size = 0x12000, scoped, tag = 'internal scratch']
  #allocation2 [shape = 'f32[36,128]{1,0:T(8,128)}', space=vmem, size = 0x5000, scoped, tag = 'scratch operand']
  #allocation3 [shape = 'f32[72,128]{1,0:T(8,128)}', space=vmem, size = 0x9000, scoped, tag = 'scratch operand']
  %s0 = inlined_call_operand.vmem [shape: f32[9,1,128], index: 0, kind: input, shape index: {}]
  %s1 = inlined_call_operand.vmem [shape: f32[4,128], index: 1, kind: input, shape index: {}]
  %s2 = inlined_call_operand.vmem [shape: f32[8,36], index: 2, kind: input, shape index: {}]
  %s3 = inlined_call_operand.vmem [shape: f32[8,1], index: 3, kind: input, shape index: {}]
  %s4 = inlined_call_operand.vmem [shape: f32[8,1], index: 4, kind: input, shape index: {}]
  %s5 = inlined_call_operand.vmem [shape: f32[8,1], index: 5, kind: input, shape index: {}]
  %s6 = inlined_call_operand.vmem [shape: f32[8,72], index: 6, kind: input, shape index: {}]
  %s7 = inlined_call_operand.vmem [shape: f32[8,1], index: 7, kind: input, shape index: {}]
  %s8 = inlined_call_operand.vmem [shape: f32[8,1], index: 8, kind: input, shape index: {}]
  %s9 = inlined_call_operand.vmem [shape: f32[8,1], index: 9, kind: input, shape index: {}]
  %s10 = inlined_call_operand.vmem [shape: f32[2,8,64], index: 10, kind: output, shape index: {}]
  %s11 = sld [smem:[#allocation0]]
  $region50: #{downconv.1} parent=0
    _
  %s13 = ssub.s32 1, %s11
  %s14 = scalar_select 0, %s13, %s11
  // Predicated region
  $region2: #{downconv.1} parent=0 // pred_check
    _
  $region3: #{downconv.1} parent=0 // pred_check_branch
    %16 = sbr.rel (0) target = $region5
  $region4: #{downconv.1} parent=0 // pred_region
    _
  $region5: #{downconv.1} parent=0 // pred_fallthru
    _
  // Predicated region
  $region6: #{downconv.1} parent=0 // pred_check
    _
  $region7: #{downconv.1} parent=0 // pred_check_branch
    %18 = sbr.rel (0) target = $region9
  $region8: #{downconv.1} parent=0 // pred_region
    _
  $region9: #{downconv.1} parent=0 // pred_fallthru
    _
  // Predicated region
  $region10: #{downconv.1} parent=0 // pred_check
    _
  $region11: #{downconv.1} parent=0 // pred_check_branch
    %20 = sbr.rel (0) target = $region13
  $region12: #{downconv.1} parent=0 // pred_region
    _
  $region13: #{downconv.1} parent=0 // pred_fallthru
    _
  // Predicated region
  $region14: #{downconv.1} parent=0 // pred_check
    _
  $region15: #{downconv.1} parent=0 // pred_check_branch
    %22 = sbr.rel (0) target = $region17
  $region16: #{downconv.1} parent=0 // pred_region
    _
  $region17: #{downconv.1} parent=0 // pred_fallthru
    _
  // Predicated region
  $region18: #{downconv.1} parent=0 // pred_check
    _
  $region19: #{downconv.1} parent=0 // pred_check_branch
    %24 = sbr.rel (0) target = $region21
  $region20: #{downconv.1} parent=0 // pred_region
    _
  $region21: #{downconv.1} parent=0 // pred_fallthru
    _
  // Predicated region
  $region22: #{downconv.1} parent=0 // pred_check
    _
  $region23: #{downconv.1} parent=0 // pred_check_branch
    %26 = sbr.rel (0) target = $region25
  $region24: #{downconv.1} parent=0 // pred_region
    _
  $region25: #{downconv.1} parent=0 // pred_fallthru
    _
  // Predicated region
  $region26: #{downconv.1} parent=0 // pred_check
    _
  $region27: #{downconv.1} parent=0 // pred_check_branch
    %28 = sbr.rel (0) target = $region29
  $region28: #{downconv.1} parent=0 // pred_region
    _
  $region29: #{downconv.1} parent=0 // pred_fallthru
    _
  // Predicated region
  $region30: #{downconv.1} parent=0 // pred_check
    _
  $region31: #{downconv.1} parent=0 // pred_check_branch
    %30 = sbr.rel (0) target = $region33
  $region32: #{downconv.1} parent=0 // pred_region
    _
  $region33: #{downconv.1} parent=0 // pred_fallthru
    _
  // Predicated region
  $region34: #{downconv.1} parent=0 // pred_check
    _
  $region35: #{downconv.1} parent=0 // pred_check_branch
    %32 = sbr.rel (0) target = $region37
  $region36: #{downconv.1} parent=0 // pred_region
    _
  $region37: #{downconv.1} parent=0 // pred_fallthru
    _
  // Predicated region
  $region38: #{downconv.1} parent=0 // pred_check
    _
  $region39: #{downconv.1} parent=0 // pred_check_branch
    %34 = sbr.rel (0) target = $region41
  $region40: #{downconv.1} parent=0 // pred_region
    _
  $region41: #{downconv.1} parent=0 // pred_fallthru
    _
  %v35 = vld [vmem:[%s1] sm:$0xf]
  %36 = vrot.lane.b32.xlu0 %v35, 9
  %v37 = vpop.permute.xlu0 %36
  %v38 = vld [vmem:[%s0] sm:$0x1]
  %v40 = vlaneseq
  %v41 = vshrl.u32 %v40, 7
  %v42 = vsub.s32 0, %v41
  %v43 = vrot.slane %v38, %v42
  %v45 = vmul.f32 %v37, %v43
  %46 = vst [vmem:[#allocation2] sm:$0xf] %v45
  %47 = vrot.lane.b32.xlu0 %v35, 8
  %v48 = vpop.permute.xlu0 %47
  %s49 = scalar_lea.vmem %s0, 1
  %v50 = vld [vmem:[%s49] sm:$0x1]
  %v52 = vlaneseq
  %v53 = vshrl.u32 %v52, 7
  %v54 = vsub.s32 0, %v53
  %v55 = vrot.slane %v50, %v54
  %v57 = vmul.f32 %v48, %v55
  %58 = vst [vmem:[#allocation2 + $0x4] sm:$0xf] %v57
  %59 = vrot.lane.b32.xlu0 %v35, 7
  %v60 = vpop.permute.xlu0 %59
  %s61 = scalar_lea.vmem %s0, 2
  %v62 = vld [vmem:[%s61] sm:$0x1]
  %v64 = vlaneseq
  %v65 = vshrl.u32 %v64, 7
  %v66 = vsub.s32 0, %v65
  %v67 = vrot.slane %v62, %v66
  %v69 = vmul.f32 %v60, %v67
  %70 = vst [vmem:[#allocation2 + $0x8] sm:$0xf] %v69
  %71 = vrot.lane.b32.xlu0 %v35, 1
  %v72 = vpop.permute.xlu0 %71
  %s73 = scalar_lea.vmem %s0, 3
  %v74 = vld [vmem:[%s73] sm:$0x1]
  %v76 = vlaneseq
  %v77 = vshrl.u32 %v76, 7
  %v78 = vsub.s32 0, %v77
  %v79 = vrot.slane %v74, %v78
  %v81 = vmul.f32 %v72, %v79
  %82 = vst [vmem:[#allocation2 + $0xc] sm:$0xf] %v81
  %83 = vst [vmem:[#allocation2 + $0x10] sm:$0xf] %v35
  %84 = vrot.lane.b32.xlu0 %v35, 127
  %v85 = vpop.permute.xlu0 %84
  %s86 = scalar_lea.vmem %s0, 5
  %v87 = vld [vmem:[%s86] sm:$0x1]
  %v89 = vlaneseq
  %v90 = vshrl.u32 %v89, 7
  %v91 = vsub.s32 0, %v90
  %v92 = vrot.slane %v87, %v91
  %v94 = vmul.f32 %v85, %v92
  %95 = vst [vmem:[#allocation2 + $0x14] sm:$0xf] %v94
  %96 = vrot.lane.b32.xlu0 %v35, 121
  %v97 = vpop.permute.xlu0 %96
  %s98 = scalar_lea.vmem %s0, 6
  %v99 = vld [vmem:[%s98] sm:$0x1]
  %v101 = vlaneseq
  %v102 = vshrl.u32 %v101, 7
  %v103 = vsub.s32 0, %v102
  %v104 = vrot.slane %v99, %v103
  %v106 = vmul.f32 %v97, %v104
  %107 = vst [vmem:[#allocation2 + $0x18] sm:$0xf] %v106
  %108 = vrot.lane.b32.xlu0 %v35, 120
  %v109 = vpop.permute.xlu0 %108
  %s110 = scalar_lea.vmem %s0, 7
  %v111 = vld [vmem:[%s110] sm:$0x1]
  %v113 = vlaneseq
  %v114 = vshrl.u32 %v113, 7
  %v115 = vsub.s32 0, %v114
  %v116 = vrot.slane %v111, %v115
  %v118 = vmul.f32 %v109, %v116
  %119 = vst [vmem:[#allocation2 + $0x1c] sm:$0xf] %v118
  %120 = vrot.lane.b32.xlu0 %v35, 119
  %v121 = vpop.permute.xlu0 %120
  %s122 = scalar_lea.vmem %s0, 8
  %v123 = vld [vmem:[%s122] sm:$0x1]
  %v125 = vlaneseq
  %v126 = vshrl.u32 %v125, 7
  %v127 = vsub.s32 0, %v126
  %v128 = vrot.slane %v123, %v127
  %v130 = vmul.f32 %v121, %v128
  %131 = vst [vmem:[#allocation2 + $0x20] sm:$0xf] %v130
  %v132 = vld [vmem:[%s2] sm:$0xff]
  %v133 = vld [vmem:[#allocation2] sm:$0xff]
  %v134 = vld [vmem:[#allocation2 + $0x8] sm:$0xff]
  %v135 = vld [vmem:[#allocation2 + $0x10] sm:$0xff]
  %v136 = vld [vmem:[#allocation2 + $0x18] sm:$0xff]
  %v137 = vld [vmem:[#allocation2 + $0x20] sm:$0xf]
  %v138 = vld [vmem:[%s3] sm:$0xff]
  %140 = vset.pattern.permute.xlu0 0
  %141 = vperm.xlu0 %140, %v138
  %v142 = vpop.permute.xlu0 %141
  %vm144 = vcmask 293888
  %v146 = vsel %vm144, %v132, 0
  %vm148 = vcmask 1043456
  %v150 = vsel %vm148, %v137, 0
  %152 = vmatprep.subr.mxu0 0.0
  %153 = vmatpush1.msra.mxu0 0.0
  %154 = vmatprep.subr.mxu0 0.0
  %155 = vmatpush1.msra.mxu0 0.0
  %156 = vmatprep.subr.mxu0 0.0
  %157 = vmatpush1.msra.mxu0 0.0
  %158 = vmatprep.subr.mxu0 0.0
  %159 = vmatpush1.msra.mxu0 0.0
  %160 = vmatprep.subr.mxu0 0.0
  %161 = vmatpush1.msra.mxu0 0.0
  %162 = vmatprep.subr.mxu0 0.0
  %163 = vmatpush1.msra.mxu0 0.0
  %164 = vmatprep.subr.mxu0 0.0
  %165 = vmatpush1.msra.mxu0 0.0
  %166 = vmatprep.subr.mxu0 0.0
  %167 = vmatpush1.msra.mxu0 0.0
  %168 = vmatprep.subr.mxu0 0.0
  %169 = vmatpush1.msra.mxu0 0.0
  %170 = vmatprep.subr.mxu0 0.0
  %171 = vmatpush1.msra.mxu0 0.0
  %172 = vmatprep.subr.mxu0 0.0
  %173 = vmatpush1.msra.mxu0 0.0
  %174 = vmatprep.subr.mxu0 0.0
  %175 = vmatpush1.msra.mxu0 %v150
  %176 = vmatprep.subr.mxu0 0.0
  %177 = vmatpush1.msra.mxu0 %v136
  %178 = vmatprep.subr.mxu0 0.0
  %179 = vmatpush1.msra.mxu0 %v135
  %180 = vmatprep.subr.mxu0 0.0
  %181 = vmatpush1.msra.mxu0 %v134
  %182 = vmatprep.subr.mxu0 0.0
  %183 = vmatpush1.msra.mxu0 %v133
  %184 = vmatprep.subr.mxu0 0.0
  %185 = vmatpush2.msra.mxu0 0.0
  %186 = vmatprep.subr.mxu0 0.0
  %187 = vmatpush2.msra.mxu0 0.0
  %188 = vmatprep.subr.mxu0 0.0
  %189 = vmatpush2.msra.mxu0 0.0
  %190 = vmatprep.subr.mxu0 0.0
  %191 = vmatpush2.msra.mxu0 0.0
  %192 = vmatprep.subr.mxu0 0.0
  %193 = vmatpush2.msra.mxu0 0.0
  %194 = vmatprep.subr.mxu0 0.0
  %195 = vmatpush2.msra.mxu0 0.0
  %196 = vmatprep.subr.mxu0 0.0
  %197 = vmatpush2.msra.mxu0 0.0
  %198 = vmatprep.subr.mxu0 0.0
  %199 = vmatpush2.msra.mxu0 0.0
  %200 = vmatprep.subr.mxu0 0.0
  %201 = vmatpush2.msra.mxu0 0.0
  %202 = vmatprep.subr.mxu0 0.0
  %203 = vmatpush2.msra.mxu0 0.0
  %204 = vmatprep.subr.mxu0 0.0
  %205 = vmatpush2.msra.mxu0 0.0
  %206 = vmatprep.subr.mxu0 0.0
  %207 = vmatpush2.msra.mxu0 0.0
  %208 = vmatprep.subr.mxu0 0.0
  %209 = vmatpush2.msra.mxu0 0.0
  %210 = vmatprep.subr.mxu0 0.0
  %211 = vmatpush2.msra.mxu0 0.0
  %212 = vmatprep.subr.mxu0 0.0
  %213 = vmatpush2.msra.mxu0 0.0
  %214 = vmatprep.subr.mxu0 0.0
  %215 = vmatpush2.msra.mxu0 0.0
  %216 = vmatprep.mubr.f32.mxu0 0.0
  %217 = vmatmul.mubr.f32.gmra.mxu0 %v146
  %v218 = vpop.f32.mrf.mxu0
  %v219 = vadd.f32 %v142, %v218
  %v220 = vpop.f32.mrf.mxu0
  %221 = vdwg.mxu0
  %222 = vadd.xlane.f32.xlu0 %v219
  %v223 = vpop.xlane.xlu0 %222
  %v224 = vmul.f32 %v219, %v219
  %225 = vadd.xlane.f32.xlu0 %v224
  %v226 = vpop.xlane.xlu0 %225
  %v227 = vmul.f32 %v223, 0.0078125
  %v228 = vmul.f32 %v226, 0.0078125
  %v229 = vmul.f32 %v227, %v227
  %v230 = vsub.f32 %v228, %v229
  %v231 = vld [vmem:[%s4] sm:$0xff]
  %v232 = vadd.f32 %v230, 1e-05
  %v233 = vrsqrt.pop %v232
  %v234 = vmul.f32 %v231, %v233
  %v235 = vld [vmem:[%s5] sm:$0xff]
  %v236 = vmul.f32 %v227, %v234
  %v237 = vsub.f32 %v235, %v236
  %239 = vset.pattern.permute.xlu0 0
  %240 = vperm.xlu0 %239, %v234
  %v241 = vpop.permute.xlu0 %240
  %v243 = vmul.f32 %v219, %v241
  %245 = vset.pattern.permute.xlu0 0
  %246 = vperm.xlu0 %245, %v237
  %v247 = vpop.permute.xlu0 %246
  %v249 = vadd.f32 %v243, %v247
  %v250 = vmax.f32 %v249, 0.0
  %251 = vrot.lane.b32.xlu0 %v250, 9
  %v252 = vpop.permute.xlu0 %251
  %v253 = vld [vmem:[%s0] sm:$0x1]
  %v255 = vlaneseq
  %v256 = vshrl.u32 %v255, 7
  %v257 = vsub.s32 0, %v256
  %v258 = vrot.slane %v253, %v257
  %v260 = vmul.f32 %v252, %v258
  %261 = vst [vmem:[#allocation3] sm:$0xff] %v260
  %262 = vrot.lane.b32.xlu0 %v250, 8
  %v263 = vpop.permute.xlu0 %262
  %v264 = vld [vmem:[%s49] sm:$0x1]
  %v266 = vlaneseq
  %v267 = vshrl.u32 %v266, 7
  %v268 = vsub.s32 0, %v267
  %v269 = vrot.slane %v264, %v268
  %v271 = vmul.f32 %v263, %v269
  %272 = vst [vmem:[#allocation3 + $0x8] sm:$0xff] %v271
  %273 = vrot.lane.b32.xlu0 %v250, 7
  %v274 = vpop.permute.xlu0 %273
  %v275 = vld [vmem:[%s61] sm:$0x1]
  %v277 = vlaneseq
  %v278 = vshrl.u32 %v277, 7
  %v279 = vsub.s32 0, %v278
  %v280 = vrot.slane %v275, %v279
  %v282 = vmul.f32 %v274, %v280
  %283 = vst [vmem:[#allocation3 + $0x10] sm:$0xff] %v282
  %284 = vrot.lane.b32.xlu0 %v250, 1
  %v285 = vpop.permute.xlu0 %284
  %v286 = vld [vmem:[%s73] sm:$0x1]
  %v288 = vlaneseq
  %v289 = vshrl.u32 %v288, 7
  %v290 = vsub.s32 0, %v289
  %v291 = vrot.slane %v286, %v290
  %v293 = vmul.f32 %v285, %v291
  %294 = vst [vmem:[#allocation3 + $0x18] sm:$0xff] %v293
  %295 = vst [vmem:[#allocation3 + $0x20] sm:$0xff] %v250
  %296 = vrot.lane.b32.xlu0 %v250, 127
  %v297 = vpop.permute.xlu0 %296
  %v298 = vld [vmem:[%s86] sm:$0x1]
  %v300 = vlaneseq
  %v301 = vshrl.u32 %v300, 7
  %v302 = vsub.s32 0, %v301
  %v303 = vrot.slane %v298, %v302
  %v305 = vmul.f32 %v297, %v303
  %306 = vst [vmem:[#allocation3 + $0x28] sm:$0xff] %v305
  %307 = vrot.lane.b32.xlu0 %v250, 121
  %v308 = vpop.permute.xlu0 %307
  %v309 = vld [vmem:[%s98] sm:$0x1]
  %v311 = vlaneseq
  %v312 = vshrl.u32 %v311, 7
  %v313 = vsub.s32 0, %v312
  %v314 = vrot.slane %v309, %v313
  %v316 = vmul.f32 %v308, %v314
  %317 = vst [vmem:[#allocation3 + $0x30] sm:$0xff] %v316
  %318 = vrot.lane.b32.xlu0 %v250, 120
  %v319 = vpop.permute.xlu0 %318
  %v320 = vld [vmem:[%s110] sm:$0x1]
  %v322 = vlaneseq
  %v323 = vshrl.u32 %v322, 7
  %v324 = vsub.s32 0, %v323
  %v325 = vrot.slane %v320, %v324
  %v327 = vmul.f32 %v319, %v325
  %328 = vst [vmem:[#allocation3 + $0x38] sm:$0xff] %v327
  %329 = vrot.lane.b32.xlu0 %v250, 119
  %v330 = vpop.permute.xlu0 %329
  %v331 = vld [vmem:[%s122] sm:$0x1]
  %v333 = vlaneseq
  %v334 = vshrl.u32 %v333, 7
  %v335 = vsub.s32 0, %v334
  %v336 = vrot.slane %v331, %v335
  %v338 = vmul.f32 %v330, %v336
  %339 = vst [vmem:[#allocation3 + $0x40] sm:$0xff] %v338
  %v340 = vld [vmem:[%s6] sm:$0xff]
  %v341 = vld [vmem:[#allocation3] sm:$0xff]
  %v342 = vld [vmem:[#allocation3 + $0x8] sm:$0xff]
  %v343 = vld [vmem:[#allocation3 + $0x10] sm:$0xff]
  %v344 = vld [vmem:[#allocation3 + $0x18] sm:$0xff]
  %v345 = vld [vmem:[#allocation3 + $0x20] sm:$0xff]
  %v346 = vld [vmem:[#allocation3 + $0x28] sm:$0xff]
  %v347 = vld [vmem:[#allocation3 + $0x30] sm:$0xff]
  %v348 = vld [vmem:[#allocation3 + $0x38] sm:$0xff]
  %v349 = vld [vmem:[#allocation3 + $0x40] sm:$0xff]
  %v350 = vld [vmem:[%s7] sm:$0xff]
  %352 = vset.pattern.permute.xlu0 0
  %353 = vperm.xlu0 %352, %v350
  %v354 = vpop.permute.xlu0 %353
  %vm356 = vcmask 588800
  %v358 = vsel %vm356, %v340, 0
  %360 = vmatprep.subr.mxu0 0.0
  %361 = vmatpush1.msra.mxu0 0.0
  %362 = vmatprep.subr.mxu0 0.0
  %363 = vmatpush1.msra.mxu0 0.0
  %364 = vmatprep.subr.mxu0 0.0
  %365 = vmatpush1.msra.mxu0 0.0
  %366 = vmatprep.subr.mxu0 0.0
  %367 = vmatpush1.msra.mxu0 0.0
  %368 = vmatprep.subr.mxu0 0.0
  %369 = vmatpush1.msra.mxu0 0.0
  %370 = vmatprep.subr.mxu0 0.0
  %371 = vmatpush1.msra.mxu0 0.0
  %372 = vmatprep.subr.mxu0 0.0
  %373 = vmatpush1.msra.mxu0 0.0
  %374 = vmatprep.subr.mxu0 0.0
  %375 = vmatpush1.msra.mxu0 %v349
  %376 = vmatprep.subr.mxu0 0.0
  %377 = vmatpush1.msra.mxu0 %v348
  %378 = vmatprep.subr.mxu0 0.0
  %379 = vmatpush1.msra.mxu0 %v347
  %380 = vmatprep.subr.mxu0 0.0
  %381 = vmatpush1.msra.mxu0 %v346
  %382 = vmatprep.subr.mxu0 0.0
  %383 = vmatpush1.msra.mxu0 %v345
  %384 = vmatprep.subr.mxu0 0.0
  %385 = vmatpush1.msra.mxu0 %v344
  %386 = vmatprep.subr.mxu0 0.0
  %387 = vmatpush1.msra.mxu0 %v343
  %388 = vmatprep.subr.mxu0 0.0
  %389 = vmatpush1.msra.mxu0 %v342
  %390 = vmatprep.subr.mxu0 0.0
  %391 = vmatpush1.msra.mxu0 %v341
  %392 = vmatprep.subr.mxu0 0.0
  %393 = vmatpush2.msra.mxu0 0.0
  %394 = vmatprep.subr.mxu0 0.0
  %395 = vmatpush2.msra.mxu0 0.0
  %396 = vmatprep.subr.mxu0 0.0
  %397 = vmatpush2.msra.mxu0 0.0
  %398 = vmatprep.subr.mxu0 0.0
  %399 = vmatpush2.msra.mxu0 0.0
  %400 = vmatprep.subr.mxu0 0.0
  %401 = vmatpush2.msra.mxu0 0.0
  %402 = vmatprep.subr.mxu0 0.0
  %403 = vmatpush2.msra.mxu0 0.0
  %404 = vmatprep.subr.mxu0 0.0
  %405 = vmatpush2.msra.mxu0 0.0
  %406 = vmatprep.subr.mxu0 0.0
  %407 = vmatpush2.msra.mxu0 0.0
  %408 = vmatprep.subr.mxu0 0.0
  %409 = vmatpush2.msra.mxu0 0.0
  %410 = vmatprep.subr.mxu0 0.0
  %411 = vmatpush2.msra.mxu0 0.0
  %412 = vmatprep.subr.mxu0 0.0
  %413 = vmatpush2.msra.mxu0 0.0
  %414 = vmatprep.subr.mxu0 0.0
  %415 = vmatpush2.msra.mxu0 0.0
  %416 = vmatprep.subr.mxu0 0.0
  %417 = vmatpush2.msra.mxu0 0.0
  %418 = vmatprep.subr.mxu0 0.0
  %419 = vmatpush2.msra.mxu0 0.0
  %420 = vmatprep.subr.mxu0 0.0
  %421 = vmatpush2.msra.mxu0 0.0
  %422 = vmatprep.subr.mxu0 0.0
  %423 = vmatpush2.msra.mxu0 0.0
  %424 = vmatprep.mubr.f32.mxu0 0.0
  %425 = vmatmul.mubr.f32.gmra.mxu0 %v358
  %v426 = vpop.f32.mrf.mxu0
  %v427 = vadd.f32 %v354, %v426
  %v428 = vpop.f32.mrf.mxu0
  %429 = vdwg.mxu0
  %430 = vadd.xlane.f32.xlu0 %v427
  %v431 = vpop.xlane.xlu0 %430
  %v432 = vmul.f32 %v427, %v427
  %433 = vadd.xlane.f32.xlu0 %v432
  %v434 = vpop.xlane.xlu0 %433
  %v435 = vmul.f32 %v431, 0.0078125
  %v436 = vmul.f32 %v434, 0.0078125
  %v437 = vmul.f32 %v435, %v435
  %v438 = vsub.f32 %v436, %v437
  %v439 = vld [vmem:[%s8] sm:$0xff]
  %v440 = vadd.f32 %v438, 1e-05
  %v441 = vrsqrt.pop %v440
  %v442 = vmul.f32 %v439, %v441
  %v443 = vld [vmem:[%s9] sm:$0xff]
  %v444 = vmul.f32 %v435, %v442
  %v445 = vsub.f32 %v443, %v444
  %447 = vset.pattern.permute.xlu0 0
  %448 = vperm.xlu0 %447, %v442
  %v449 = vpop.permute.xlu0 %448
  %v451 = vmul.f32 %v427, %v449
  %453 = vset.pattern.permute.xlu0 0
  %454 = vperm.xlu0 %453, %v445
  %v455 = vpop.permute.xlu0 %454
  %v457 = vadd.f32 %v451, %v455
  %v458 = vmax.f32 %v457, 0.0
  %vm459 = vcmask 523264
  %460 = vst.msk [vmem:[%s10] sm:$0xff] %vm459, %v458
  %462 = vrot.lane.b32.xlu0 %v458, 64
  %v463 = vpop.permute.xlu0 %462
  %s465 = scalar_lea.vmem %s10, 8
  %466 = vst.msk [vmem:[%s465] sm:$0xff] %vm459, %v463
  // Predicated region
  $region42: #{downconv.1} parent=0 // pred_check
    _
  $region43: #{downconv.1} parent=0 // pred_check_branch
    %468 = sbr.rel (0) target = $region45
  $region44: #{downconv.1} parent=0 // pred_region
    _
  $region45: #{downconv.1} parent=0 // pred_fallthru
    _
  // Predicated region
  $region46: #{downconv.1} parent=0 // pred_check
    _
  $region47: #{downconv.1} parent=0 // pred_check_branch
    %470 = sbr.rel (0) target = $region49
  $region48: #{downconv.1} parent=0 // pred_region
    _
  $region49: #{downconv.1} parent=0 // pred_fallthru
    _

</llo_original>
